<compile_context>
chip_gen: v6e
topology: v6e:2x2x1
jax: 0.10.0
libtpu: 0.0.40
codegen_flags: <defaults>
</compile_context>

<pallas_src>
import jax
import jax.numpy as jnp
from jax.experimental import pallas as pl
from jax.experimental.pallas import tpu as pltpu


def _value_embedding_kernel(x_ref, w_ref, b_ref, o_ref):
    # x_ref: (TM, R)    packed input values (R consecutive flat rows per row)
    # w_ref: (R, R*D)   block-diagonal expanded weight:
    #                   w_ref[k, k*D:(k+1)*D] = weight, 0 elsewhere
    # b_ref: (1, R*D)   bias tiled R times
    # o_ref: (TM, R*D)  lane-dense output slab tile
    #
    # Every output column has exactly one non-zero weight, so with HIGHEST
    # (multi-pass f32) precision the matmul reproduces the elementwise
    # x * w to f32 rounding; the MXU only serves as a free lane-broadcaster.
    acc = jnp.dot(x_ref[...], w_ref[...],
                  preferred_element_type=jnp.float32,
                  precision=jax.lax.Precision.HIGHEST)
    o_ref[...] = (acc + b_ref[...]).astype(o_ref.dtype)


def _round_up(a, b):
    return ((a + b - 1) // b) * b


def value_embedding(x, weight, bias, *, tile_rows=2048, target_lanes=512):
    """x: (b, l, v); weight: (D, 1); bias: (D,) -> (b, l, v, D)."""
    b, l, v = x.shape
    d = weight.shape[0]
    n = b * l * v

    # Pack factor: smallest power of two R such that R*D >= target_lanes, so
    # the output block's lane width is a large multiple of 128 (R=8 for D=64).
    # R is also the matmul contraction dim, so it must stay small: MXU work
    # per output element scales with R (mem-bound headroom gone near R~64).
    r = 1
    while r * d < target_lanes:
        r *= 2

    rows = pl.cdiv(n, r)                       # slab rows needed
    tm = min(tile_rows, _round_up(rows, 8))    # tile rows (multiple of 8)
    rows_pad = _round_up(rows, tm)             # pad so the grid divides evenly
    n_pad = rows_pad * r

    x_flat = x.reshape(n)
    if n_pad != n:
        x_flat = jnp.pad(x_flat, (0, n_pad - n))
    x_slab = x_flat.reshape(rows_pad, r)

    # Expanded parameters (built once on host; resident VMEM blocks).
    #   w_exp[k, g*D + j] = weight[j] if g == k else 0
    #   b_exp[0, g*D + j] = bias[j]
    w_exp = (jnp.eye(r, dtype=jnp.float32)[:, :, None]
             * weight.reshape(1, 1, d)).reshape(r, r * d).astype(x.dtype)
    b_exp = jnp.tile(bias.reshape(1, d), (1, r)).astype(x.dtype)

    out_slab = pl.pallas_call(
        _value_embedding_kernel,
        out_shape=jax.ShapeDtypeStruct((rows_pad, r * d), x.dtype),
        grid_spec=pltpu.PrefetchScalarGridSpec(
            num_scalar_prefetch=0,
            grid=(rows_pad // tm,),
            in_specs=[
                pl.BlockSpec((tm, r), lambda i: (i, 0)),        # packed x rows
                pl.BlockSpec((r, r * d), lambda i: (0, 0)),     # resident W
                pl.BlockSpec((1, r * d), lambda i: (0, 0)),     # resident bias
            ],
            out_specs=pl.BlockSpec((tm, r * d), lambda i: (i, 0)),
        ),
        compiler_params=pltpu.CompilerParams(
            dimension_semantics=("parallel",)),
    )(x_slab, w_exp, b_exp)

    # Row-major (rows_pad, r*d) -> (rows_pad*r, d) is a free reshape.
    out_flat = out_slab.reshape(rows_pad * r, d)
    if n_pad != n:
        out_flat = out_flat[:n]
    return out_flat.reshape(b, l, v, d)


if __name__ == "__main__":
    # Small shapes consistent with the module's forward: x is (b, l, v).
    b, l, v = 2, 8, 4
    input_dim, output_dim = 1, 64

    key = jax.random.PRNGKey(0)
    kx, kw, kb = jax.random.split(key, 3)

    x = jax.random.normal(kx, (b, l, v), dtype=jnp.float32)

    # PyTorch Linear default init: U(-1/sqrt(in), 1/sqrt(in)).
    bound = 1.0 / (input_dim ** 0.5)
    weight = jax.random.uniform(kw, (output_dim, input_dim), jnp.float32,
                                minval=-bound, maxval=bound)
    bias = jax.random.uniform(kb, (output_dim,), jnp.float32,
                              minval=-bound, maxval=bound)

    out = value_embedding(x, weight, bias)
    jax.block_until_ready(out)

    # Reference check in plain JAX (same math as nn.Linear on unsqueezed
    # input).  Tolerance allows multi-pass f32 MXU rounding (<= ~4e-6 rel)
    # while still failing loudly on any single-pass bf16 truncation (~1e-3).
    ref = x[..., None] * weight.reshape(1, 1, 1, output_dim) + bias
    assert out.shape == (b, l, v, output_dim)
    assert jnp.allclose(out, ref, atol=1e-5, rtol=1e-5)

    print("KERNEL_OK")
</pallas_src>

<mosaic_0001>
module attributes {stable_mosaic.version = 11 : i64} {
  func.func @_value_embedding_kernel(%arg0: i32, %arg1: memref<8x8xf32, #tpu.memory_space<vmem>>, %arg2: memref<8x512xf32, #tpu.memory_space<vmem>>, %arg3: memref<1x512xf32, #tpu.memory_space<vmem>>, %arg4: memref<8x512xf32, #tpu.memory_space<vmem>>) attributes {dimension_semantics = [#tpu.dimension_semantics<parallel>], iteration_bounds = array<i64: 1>, scalar_prefetch = 0 : i64, scratch_operands = 0 : i64, tpu.core_type = #tpu.core_type<tc>, window_params = [{transform_indices = @transform_0, window_bounds = array<i64: 8, 8>}, {pipeline_mode = #tpu.pipeline_mode<synchronous>, transform_indices = @transform_1, window_bounds = array<i64: 8, 512>}, {pipeline_mode = #tpu.pipeline_mode<synchronous>, transform_indices = @transform_2, window_bounds = array<i64: 1, 512>}, {transform_indices = @transform_3, window_bounds = array<i64: 8, 512>}]} {
    %c0 = arith.constant 0 : index
    %c0_0 = arith.constant 0 : index
    %0 = vector.load %arg1[%c0, %c0_0] : memref<8x8xf32, #tpu.memory_space<vmem>>, vector<8x8xf32>
    %c0_1 = arith.constant 0 : index
    %c0_2 = arith.constant 0 : index
    %1 = vector.load %arg2[%c0_1, %c0_2] : memref<8x512xf32, #tpu.memory_space<vmem>>, vector<8x512xf32>
    %cst = arith.constant dense<0.000000e+00> : vector<8x512xf32>
    %2 = tpu.matmul %0, %1, %cst {dimension_numbers = #tpu.dot_dimension_numbers<[1], [0], [0], [1], [0, 0, 1, 1], [], []>, precision = #tpu.contract_precision<fp32>} : vector<8x8xf32>, vector<8x512xf32>, vector<8x512xf32> -> vector<8x512xf32>
    %c0_3 = arith.constant 0 : index
    %c0_4 = arith.constant 0 : index
    %3 = vector.load %arg3[%c0_3, %c0_4] : memref<1x512xf32, #tpu.memory_space<vmem>>, vector<1x512xf32>
    %4 = vector.broadcast %3 : vector<1x512xf32> to vector<8x512xf32>
    %5 = arith.addf %2, %4 : vector<8x512xf32>
    %c0_5 = arith.constant 0 : index
    %c0_6 = arith.constant 0 : index
    %6 = vector.load %arg4[%c0_5, %c0_6] : memref<8x512xf32, #tpu.memory_space<vmem>>, vector<8x512xf32>
    tpu.vector_store %arg4[%c0_5, %c0_6], %5 {strides = array<i32>} : memref<8x512xf32, #tpu.memory_space<vmem>>, vector<8x512xf32>,
    return
  }
  func.func @transform_0(%arg0: i32) -> (i32, i32) {
    %c0_i32 = arith.constant 0 : i32
    %c0_i32_0 = arith.constant 0 : i32
    return %arg0, %c0_i32 : i32, i32
  }
  func.func @transform_1(%arg0: i32) -> (i32, i32) {
    %c0_i32 = arith.constant 0 : i32
    %c0_i32_0 = arith.constant 0 : i32
    %c0_i32_1 = arith.constant 0 : i32
    return %c0_i32, %c0_i32_0 : i32, i32
  }
  func.func @transform_2(%arg0: i32) -> (i32, i32) {
    %c0_i32 = arith.constant 0 : i32
    %c0_i32_0 = arith.constant 0 : i32
    %c0_i32_1 = arith.constant 0 : i32
    return %c0_i32, %c0_i32_0 : i32, i32
  }
  func.func @transform_3(%arg0: i32) -> (i32, i32) {
    %c0_i32 = arith.constant 0 : i32
    %c0_i32_0 = arith.constant 0 : i32
    return %arg0, %c0_i32 : i32, i32
  }
}

</mosaic_0001>

<llo_original>
// kernel: tpu_custom_call.1
$region0: #{tpu_custom_call.1}
  #allocation0 [shape = 'u32[]', space=smem, size = 0x4, offset = 0x4, fixed_abs, tag = 'smem constant byte address 0x4 - core index']
  #allocation1 [shape = 'u32[144,128]{1,0:T(1,128)}', space=vmem, size = 0x12000, scoped, tag = 'internal scratch']
  %s0 = inlined_call_operand.hbm [shape: f32[8,8], index: 0, kind: input, shape index: {}]
  %s1 = inlined_call_operand.hbm [shape: f32[8,512], index: 1, kind: input, shape index: {}]
  %s2 = inlined_call_operand.hbm [shape: f32[1,512], index: 2, kind: input, shape index: {}]
  %s3 = inlined_call_operand.hbm [shape: f32[8,512], index: 3, kind: output, shape index: {}]
  %s4 = sld [smem:[#allocation0]]
  $region34: #{tpu_custom_call.1} parent=0
    _
  %s6 = ssub.s32 1, %s4
  %s7 = scalar_select 0, %s6, %s4
  $region1: #{tpu_custom_call.1} parent=0
    #allocation2 [shape = 'u8[4096]{0}', space=vmem, size = 0x1000, scoped, tag = 'input window, operand 0, single buffered']
    #allocation3 [shape = 's32[1]{0}', space=sflag, size = 0x4, scoped, tag = 'scoped memory for tpu_custom_call.1']
    #allocation4 [shape = 's32[1]{0}', space=sflag, size = 0x4, scoped, tag = 'scoped memory for tpu_custom_call.1']
    #allocation5 [shape = 'u8[16384]{0}', space=vmem, size = 0x4000, scoped, tag = 'input window, operand 1, single buffered']
    #allocation6 [shape = 's32[1]{0}', space=sflag, size = 0x4, scoped, tag = 'scoped memory for tpu_custom_call.1']
    #allocation7 [shape = 'u8[2048]{0}', space=vmem, size = 0x800, scoped, tag = 'input window, operand 2, single buffered']
    #allocation8 [shape = 'u8[16384]{0}', space=vmem, size = 0x4000, scoped, tag = 'output window, operand 0, single buffered']
    %8 = vsyncpa [#allocation3], 0
    %9 = vsyncpa [#allocation6], 0
    %10 = vsyncpa [#allocation4], 0
    // Predicated region
    $region2: #{tpu_custom_call.1} parent=1 // pred_check
      _
    $region3: #{tpu_custom_call.1} parent=1 // pred_check_branch
      %12 = sbr.rel (0) target = $region5
    $region4: #{tpu_custom_call.1} parent=1 // pred_region
      %s14 = ssub.s32 128, 128
      %15 = vsyncadd [#allocation3], %s14
      %s17 = sshll.u32 [#allocation2], 4
      %s18 = int_to_ptr.vmem [resolvable:$true] %s17
      %20 = dma.hbm_to_vmem [thread:$0]  %s0, 128, %s18, [#allocation3]
    $region5: #{tpu_custom_call.1} parent=1 // pred_fallthru
      _
    // Predicated region
    $region6: #{tpu_custom_call.1} parent=1 // pred_check
      _
    $region7: #{tpu_custom_call.1} parent=1 // pred_check_branch
      %22 = sbr.rel (0) target = $region9
    $region8: #{tpu_custom_call.1} parent=1 // pred_region
      %s24 = ssub.s32 512, 512
      %25 = vsyncadd [#allocation6], %s24
      %s27 = sshll.u32 [#allocation5], 4
      %s28 = int_to_ptr.vmem [resolvable:$true] %s27
      %30 = dma.hbm_to_vmem [thread:$0]  %s1, 512, %s28, [#allocation6]
    $region9: #{tpu_custom_call.1} parent=1 // pred_fallthru
      _
    // Predicated region
    $region10: #{tpu_custom_call.1} parent=1 // pred_check
      _
    $region11: #{tpu_custom_call.1} parent=1 // pred_check_branch
      %32 = sbr.rel (0) target = $region13
    $region12: #{tpu_custom_call.1} parent=1 // pred_region
      %s34 = ssub.s32 64, 64
      %35 = vsyncadd [#allocation6], %s34
      %s37 = sshll.u32 [#allocation7], 4
      %s38 = int_to_ptr.vmem [resolvable:$true] %s37
      %40 = dma.hbm_to_vmem [thread:$0]  %s2, 64, %s38, [#allocation6]
    $region13: #{tpu_custom_call.1} parent=1 // pred_fallthru
      _
    // Predicated region
    $region14: #{tpu_custom_call.1} parent=1 // pred_check
      _
    $region15: #{tpu_custom_call.1} parent=1 // pred_check_branch
      %42 = sbr.rel (0) target = $region17
    $region16: #{tpu_custom_call.1} parent=1 // pred_region
      %43 = dma.done [#allocation3], 128
    $region17: #{tpu_custom_call.1} parent=1 // pred_fallthru
      _
    // Predicated region
    $region18: #{tpu_custom_call.1} parent=1 // pred_check
      _
    $region19: #{tpu_custom_call.1} parent=1 // pred_check_branch
      %45 = sbr.rel (0) target = $region21
    $region20: #{tpu_custom_call.1} parent=1 // pred_region
      %46 = dma.done [#allocation6], 512
    $region21: #{tpu_custom_call.1} parent=1 // pred_fallthru
      _
    // Predicated region
    $region22: #{tpu_custom_call.1} parent=1 // pred_check
      _
    $region23: #{tpu_custom_call.1} parent=1 // pred_check_branch
      %48 = sbr.rel (0) target = $region25
    $region24: #{tpu_custom_call.1} parent=1 // pred_region
      %49 = dma.done [#allocation6], 64
    $region25: #{tpu_custom_call.1} parent=1 // pred_fallthru
      _
    %v50 = vld [vmem:[#allocation2] sm:$0xff]
    %v51 = vld [vmem:[#allocation5] sm:$0xff]
    %v52 = vld [vmem:[#allocation5 + $0x8] sm:$0xff]
    %v53 = vld [vmem:[#allocation5 + $0x10] sm:$0xff]
    %v54 = vld [vmem:[#allocation5 + $0x18] sm:$0xff]
    %v55 = vld [vmem:[#allocation7] sm:$0xf]
    %v57 = vlaneseq
    %v58 = vshrl.u32 %v57, 7
    %v59 = vsub.s32 0, %v58
    %v60 = vrot.slane %v55, %v59
    %v61 = vlaneseq
    %v62 = vshrl.u32 %v61, 7
    %v63 = vsub.s32 1, %v62
    %v64 = vrot.slane %v55, %v63
    %v65 = vlaneseq
    %v66 = vshrl.u32 %v65, 7
    %v67 = vsub.s32 2, %v66
    %v68 = vrot.slane %v55, %v67
    %v69 = vlaneseq
    %v70 = vshrl.u32 %v69, 7
    %v71 = vsub.s32 3, %v70
    %v72 = vrot.slane %v55, %v71
    %vm77 = vcmask 64512
    %v79 = vsel %vm77, %v50, 0
    %81 = vmatprep.subr.mxu0 0.0
    %82 = vmatpush1.msra.mxu0 0.0
    %83 = vmatprep.subr.mxu0 0.0
    %84 = vmatpush1.msra.mxu0 0.0
    %85 = vmatprep.subr.mxu0 0.0
    %86 = vmatpush1.msra.mxu0 0.0
    %87 = vmatprep.subr.mxu0 0.0
    %88 = vmatpush1.msra.mxu0 0.0
    %89 = vmatprep.subr.mxu0 0.0
    %90 = vmatpush1.msra.mxu0 0.0
    %91 = vmatprep.subr.mxu0 0.0
    %92 = vmatpush1.msra.mxu0 0.0
    %93 = vmatprep.subr.mxu0 0.0
    %94 = vmatpush1.msra.mxu0 0.0
    %95 = vmatprep.subr.mxu0 0.0
    %96 = vmatpush1.msra.mxu0 0.0
    %97 = vmatprep.subr.mxu0 0.0
    %98 = vmatpush1.msra.mxu0 0.0
    %99 = vmatprep.subr.mxu0 0.0
    %100 = vmatpush1.msra.mxu0 0.0
    %101 = vmatprep.subr.mxu0 0.0
    %102 = vmatpush1.msra.mxu0 0.0
    %103 = vmatprep.subr.mxu0 0.0
    %104 = vmatpush1.msra.mxu0 0.0
    %105 = vmatprep.subr.mxu0 0.0
    %106 = vmatpush1.msra.mxu0 0.0
    %107 = vmatprep.subr.mxu0 0.0
    %108 = vmatpush1.msra.mxu0 0.0
    %109 = vmatprep.subr.mxu0 0.0
    %110 = vmatpush1.msra.mxu0 0.0
    %v111 = vand.u32 %v52, 4294901760
    %112 = vmatprep.subr.mxu0 %v111
    %v113 = vand.u32 %v51, 4294901760
    %114 = vmatpush1.msra.mxu0 %v113
    %115 = vmatprep.subr.mxu0 0.0
    %116 = vmatpush2.msra.mxu0 0.0
    %117 = vmatprep.subr.mxu0 0.0
    %118 = vmatpush2.msra.mxu0 0.0
    %119 = vmatprep.subr.mxu0 0.0
    %120 = vmatpush2.msra.mxu0 0.0
    %121 = vmatprep.subr.mxu0 0.0
    %122 = vmatpush2.msra.mxu0 0.0
    %123 = vmatprep.subr.mxu0 0.0
    %124 = vmatpush2.msra.mxu0 0.0
    %125 = vmatprep.subr.mxu0 0.0
    %126 = vmatpush2.msra.mxu0 0.0
    %127 = vmatprep.subr.mxu0 0.0
    %128 = vmatpush2.msra.mxu0 0.0
    %129 = vmatprep.subr.mxu0 0.0
    %130 = vmatpush2.msra.mxu0 0.0
    %131 = vmatprep.subr.mxu0 0.0
    %132 = vmatpush2.msra.mxu0 0.0
    %133 = vmatprep.subr.mxu0 0.0
    %134 = vmatpush2.msra.mxu0 0.0
    %135 = vmatprep.subr.mxu0 0.0
    %136 = vmatpush2.msra.mxu0 0.0
    %137 = vmatprep.subr.mxu0 0.0
    %138 = vmatpush2.msra.mxu0 0.0
    %139 = vmatprep.subr.mxu0 0.0
    %140 = vmatpush2.msra.mxu0 0.0
    %141 = vmatprep.subr.mxu0 0.0
    %142 = vmatpush2.msra.mxu0 0.0
    %143 = vmatprep.subr.mxu0 0.0
    %144 = vmatpush2.msra.mxu0 0.0
    %145 = vmatprep.subr.mxu0 0.0
    %146 = vmatpush2.msra.mxu0 0.0
    %147 = vmatprep.mubr.f32.mxu0 0.0
    %v148 = vand.u32 %v79, 4294901760
    %v149 = vsub.f32 %v79, %v148
    %v150 = vand.u32 %v149, 4294901760
    %v151 = vsub.f32 %v149, %v150
    %v152 = vand.u32 %v151, 4294901760
    %153 = vmatmul.mubr.f32.gmra.mxu0 %v152
    %v154 = vpop.f32.mrf.mxu0
    %v155 = vadd.f32 %v60, %v154
    %v156 = vpop.f32.mrf.mxu0
    %v157 = vadd.f32 %v64, %v156
    %158 = vdwg.mxu0
    %159 = vmatprep.subr.mxu0 0.0
    %160 = vmatpush1.msra.mxu0 0.0
    %161 = vmatprep.subr.mxu0 0.0
    %162 = vmatpush1.msra.mxu0 0.0
    %163 = vmatprep.subr.mxu0 0.0
    %164 = vmatpush1.msra.mxu0 0.0
    %165 = vmatprep.subr.mxu0 0.0
    %166 = vmatpush1.msra.mxu0 0.0
    %167 = vmatprep.subr.mxu0 0.0
    %168 = vmatpush1.msra.mxu0 0.0
    %169 = vmatprep.subr.mxu0 0.0
    %170 = vmatpush1.msra.mxu0 0.0
    %171 = vmatprep.subr.mxu0 0.0
    %172 = vmatpush1.msra.mxu0 0.0
    %173 = vmatprep.subr.mxu0 0.0
    %174 = vmatpush1.msra.mxu0 0.0
    %175 = vmatprep.subr.mxu0 0.0
    %176 = vmatpush1.msra.mxu0 0.0
    %177 = vmatprep.subr.mxu0 0.0
    %178 = vmatpush1.msra.mxu0 0.0
    %179 = vmatprep.subr.mxu0 0.0
    %180 = vmatpush1.msra.mxu0 0.0
    %181 = vmatprep.subr.mxu0 0.0
    %182 = vmatpush1.msra.mxu0 0.0
    %183 = vmatprep.subr.mxu0 0.0
    %184 = vmatpush1.msra.mxu0 0.0
    %185 = vmatprep.subr.mxu0 0.0
    %186 = vmatpush1.msra.mxu0 0.0
    %187 = vmatprep.subr.mxu0 0.0
    %188 = vmatpush1.msra.mxu0 0.0
    %v189 = vand.u32 %v52, 4294901760
    %v190 = vsub.f32 %v52, %v189
    %v191 = vand.u32 %v190, 4294901760
    %v192 = vsub.f32 %v190, %v191
    %v193 = vand.u32 %v192, 4294901760
    %194 = vmatprep.subr.mxu0 %v193
    %v195 = vand.u32 %v51, 4294901760
    %v196 = vsub.f32 %v51, %v195
    %v197 = vand.u32 %v196, 4294901760
    %v198 = vsub.f32 %v196, %v197
    %v199 = vand.u32 %v198, 4294901760
    %200 = vmatpush1.msra.mxu0 %v199
    %201 = vmatprep.subr.mxu0 0.0
    %202 = vmatpush2.msra.mxu0 0.0
    %203 = vmatprep.subr.mxu0 0.0
    %204 = vmatpush2.msra.mxu0 0.0
    %205 = vmatprep.subr.mxu0 0.0
    %206 = vmatpush2.msra.mxu0 0.0
    %207 = vmatprep.subr.mxu0 0.0
    %208 = vmatpush2.msra.mxu0 0.0
    %209 = vmatprep.subr.mxu0 0.0
    %210 = vmatpush2.msra.mxu0 0.0
    %211 = vmatprep.subr.mxu0 0.0
    %212 = vmatpush2.msra.mxu0 0.0
    %213 = vmatprep.subr.mxu0 0.0
    %214 = vmatpush2.msra.mxu0 0.0
    %215 = vmatprep.subr.mxu0 0.0
    %216 = vmatpush2.msra.mxu0 0.0
    %217 = vmatprep.subr.mxu0 0.0
    %218 = vmatpush2.msra.mxu0 0.0
    %219 = vmatprep.subr.mxu0 0.0
    %220 = vmatpush2.msra.mxu0 0.0
    %221 = vmatprep.subr.mxu0 0.0
    %222 = vmatpush2.msra.mxu0 0.0
    %223 = vmatprep.subr.mxu0 0.0
    %224 = vmatpush2.msra.mxu0 0.0
    %225 = vmatprep.subr.mxu0 0.0
    %226 = vmatpush2.msra.mxu0 0.0
    %227 = vmatprep.subr.mxu0 0.0
    %228 = vmatpush2.msra.mxu0 0.0
    %229 = vmatprep.subr.mxu0 0.0
    %230 = vmatpush2.msra.mxu0 0.0
    %231 = vmatprep.subr.mxu0 0.0
    %232 = vmatpush2.msra.mxu0 0.0
    %233 = vmatprep.mubr.f32.mxu0 0.0
    %v234 = vand.u32 %v79, 4294901760
    %235 = vmatmul.mubr.f32.gmra.mxu0 %v234
    %v236 = vpop.f32.mrf.mxu0
    %v237 = vadd.f32 %v155, %v236
    %v238 = vpop.f32.mrf.mxu0
    %v239 = vadd.f32 %v157, %v238
    %240 = vdwg.mxu0
    %241 = vmatprep.subr.mxu0 0.0
    %242 = vmatpush1.msra.mxu0 0.0
    %243 = vmatprep.subr.mxu0 0.0
    %244 = vmatpush1.msra.mxu0 0.0
    %245 = vmatprep.subr.mxu0 0.0
    %246 = vmatpush1.msra.mxu0 0.0
    %247 = vmatprep.subr.mxu0 0.0
    %248 = vmatpush1.msra.mxu0 0.0
    %249 = vmatprep.subr.mxu0 0.0
    %250 = vmatpush1.msra.mxu0 0.0
    %251 = vmatprep.subr.mxu0 0.0
    %252 = vmatpush1.msra.mxu0 0.0
    %253 = vmatprep.subr.mxu0 0.0
    %254 = vmatpush1.msra.mxu0 0.0
    %255 = vmatprep.subr.mxu0 0.0
    %256 = vmatpush1.msra.mxu0 0.0
    %257 = vmatprep.subr.mxu0 0.0
    %258 = vmatpush1.msra.mxu0 0.0
    %259 = vmatprep.subr.mxu0 0.0
    %260 = vmatpush1.msra.mxu0 0.0
    %261 = vmatprep.subr.mxu0 0.0
    %262 = vmatpush1.msra.mxu0 0.0
    %263 = vmatprep.subr.mxu0 0.0
    %264 = vmatpush1.msra.mxu0 0.0
    %265 = vmatprep.subr.mxu0 0.0
    %266 = vmatpush1.msra.mxu0 0.0
    %267 = vmatprep.subr.mxu0 0.0
    %268 = vmatpush1.msra.mxu0 0.0
    %269 = vmatprep.subr.mxu0 0.0
    %270 = vmatpush1.msra.mxu0 0.0
    %v271 = vand.u32 %v52, 4294901760
    %v272 = vsub.f32 %v52, %v271
    %273 = vmatprep.subr.mxu0 %v272
    %v274 = vand.u32 %v51, 4294901760
    %v275 = vsub.f32 %v51, %v274
    %276 = vmatpush1.msra.mxu0 %v275
    %277 = vmatprep.subr.mxu0 0.0
    %278 = vmatpush2.msra.mxu0 0.0
    %279 = vmatprep.subr.mxu0 0.0
    %280 = vmatpush2.msra.mxu0 0.0
    %281 = vmatprep.subr.mxu0 0.0
    %282 = vmatpush2.msra.mxu0 0.0
    %283 = vmatprep.subr.mxu0 0.0
    %284 = vmatpush2.msra.mxu0 0.0
    %285 = vmatprep.subr.mxu0 0.0
    %286 = vmatpush2.msra.mxu0 0.0
    %287 = vmatprep.subr.mxu0 0.0
    %288 = vmatpush2.msra.mxu0 0.0
    %289 = vmatprep.subr.mxu0 0.0
    %290 = vmatpush2.msra.mxu0 0.0
    %291 = vmatprep.subr.mxu0 0.0
    %292 = vmatpush2.msra.mxu0 0.0
    %293 = vmatprep.subr.mxu0 0.0
    %294 = vmatpush2.msra.mxu0 0.0
    %295 = vmatprep.subr.mxu0 0.0
    %296 = vmatpush2.msra.mxu0 0.0
    %297 = vmatprep.subr.mxu0 0.0
    %298 = vmatpush2.msra.mxu0 0.0
    %299 = vmatprep.subr.mxu0 0.0
    %300 = vmatpush2.msra.mxu0 0.0
    %301 = vmatprep.subr.mxu0 0.0
    %302 = vmatpush2.msra.mxu0 0.0
    %303 = vmatprep.subr.mxu0 0.0
    %304 = vmatpush2.msra.mxu0 0.0
    %305 = vmatprep.subr.mxu0 0.0
    %306 = vmatpush2.msra.mxu0 0.0
    %307 = vmatprep.subr.mxu0 0.0
    %308 = vmatpush2.msra.mxu0 0.0
    %309 = vmatprep.mubr.f32.mxu0 0.0
    %v310 = vand.u32 %v79, 4294901760
    %v311 = vsub.f32 %v79, %v310
    %312 = vmatmul.mubr.f32.gmra.mxu0 %v311
    %v313 = vpop.f32.mrf.mxu0
    %v314 = vadd.f32 %v237, %v313
    %v315 = vpop.f32.mrf.mxu0
    %v316 = vadd.f32 %v239, %v315
    %317 = vdwg.mxu0
    %318 = vmatprep.subr.mxu0 0.0
    %319 = vmatpush1.msra.mxu0 0.0
    %320 = vmatprep.subr.mxu0 0.0
    %321 = vmatpush1.msra.mxu0 0.0
    %322 = vmatprep.subr.mxu0 0.0
    %323 = vmatpush1.msra.mxu0 0.0
    %324 = vmatprep.subr.mxu0 0.0
    %325 = vmatpush1.msra.mxu0 0.0
    %326 = vmatprep.subr.mxu0 0.0
    %327 = vmatpush1.msra.mxu0 0.0
    %328 = vmatprep.subr.mxu0 0.0
    %329 = vmatpush1.msra.mxu0 0.0
    %330 = vmatprep.subr.mxu0 0.0
    %331 = vmatpush1.msra.mxu0 0.0
    %332 = vmatprep.subr.mxu0 0.0
    %333 = vmatpush1.msra.mxu0 0.0
    %334 = vmatprep.subr.mxu0 0.0
    %335 = vmatpush1.msra.mxu0 0.0
    %336 = vmatprep.subr.mxu0 0.0
    %337 = vmatpush1.msra.mxu0 0.0
    %338 = vmatprep.subr.mxu0 0.0
    %339 = vmatpush1.msra.mxu0 0.0
    %340 = vmatprep.subr.mxu0 0.0
    %341 = vmatpush1.msra.mxu0 0.0
    %342 = vmatprep.subr.mxu0 0.0
    %343 = vmatpush1.msra.mxu0 0.0
    %344 = vmatprep.subr.mxu0 0.0
    %345 = vmatpush1.msra.mxu0 0.0
    %346 = vmatprep.subr.mxu0 0.0
    %347 = vmatpush1.msra.mxu0 0.0
    %v348 = vand.u32 %v52, 4294901760
    %349 = vmatprep.subr.mxu0 %v348
    %v350 = vand.u32 %v51, 4294901760
    %351 = vmatpush1.msra.mxu0 %v350
    %352 = vmatprep.subr.mxu0 0.0
    %353 = vmatpush2.msra.mxu0 0.0
    %354 = vmatprep.subr.mxu0 0.0
    %355 = vmatpush2.msra.mxu0 0.0
    %356 = vmatprep.subr.mxu0 0.0
    %357 = vmatpush2.msra.mxu0 0.0
    %358 = vmatprep.subr.mxu0 0.0
    %359 = vmatpush2.msra.mxu0 0.0
    %360 = vmatprep.subr.mxu0 0.0
    %361 = vmatpush2.msra.mxu0 0.0
    %362 = vmatprep.subr.mxu0 0.0
    %363 = vmatpush2.msra.mxu0 0.0
    %364 = vmatprep.subr.mxu0 0.0
    %365 = vmatpush2.msra.mxu0 0.0
    %366 = vmatprep.subr.mxu0 0.0
    %367 = vmatpush2.msra.mxu0 0.0
    %368 = vmatprep.subr.mxu0 0.0
    %369 = vmatpush2.msra.mxu0 0.0
    %370 = vmatprep.subr.mxu0 0.0
    %371 = vmatpush2.msra.mxu0 0.0
    %372 = vmatprep.subr.mxu0 0.0
    %373 = vmatpush2.msra.mxu0 0.0
    %374 = vmatprep.subr.mxu0 0.0
    %375 = vmatpush2.msra.mxu0 0.0
    %376 = vmatprep.subr.mxu0 0.0
    %377 = vmatpush2.msra.mxu0 0.0
    %378 = vmatprep.subr.mxu0 0.0
    %379 = vmatpush2.msra.mxu0 0.0
    %380 = vmatprep.subr.mxu0 0.0
    %381 = vmatpush2.msra.mxu0 0.0
    %382 = vmatprep.subr.mxu0 0.0
    %383 = vmatpush2.msra.mxu0 0.0
    %384 = vmatprep.mubr.f32.mxu0 0.0
    %v385 = vand.u32 %v79, 4294901760
    %v386 = vsub.f32 %v79, %v385
    %v387 = vand.u32 %v386, 4294901760
    %388 = vmatmul.mubr.f32.gmra.mxu0 %v387
    %v389 = vpop.f32.mrf.mxu0
    %v390 = vadd.f32 %v314, %v389
    %v391 = vpop.f32.mrf.mxu0
    %v392 = vadd.f32 %v316, %v391
    %393 = vdwg.mxu0
    %394 = vmatprep.subr.mxu0 0.0
    %395 = vmatpush1.msra.mxu0 0.0
    %396 = vmatprep.subr.mxu0 0.0
    %397 = vmatpush1.msra.mxu0 0.0
    %398 = vmatprep.subr.mxu0 0.0
    %399 = vmatpush1.msra.mxu0 0.0
    %400 = vmatprep.subr.mxu0 0.0
    %401 = vmatpush1.msra.mxu0 0.0
    %402 = vmatprep.subr.mxu0 0.0
    %403 = vmatpush1.msra.mxu0 0.0
    %404 = vmatprep.subr.mxu0 0.0
    %405 = vmatpush1.msra.mxu0 0.0
    %406 = vmatprep.subr.mxu0 0.0
    %407 = vmatpush1.msra.mxu0 0.0
    %408 = vmatprep.subr.mxu0 0.0
    %409 = vmatpush1.msra.mxu0 0.0
    %410 = vmatprep.subr.mxu0 0.0
    %411 = vmatpush1.msra.mxu0 0.0
    %412 = vmatprep.subr.mxu0 0.0
    %413 = vmatpush1.msra.mxu0 0.0
    %414 = vmatprep.subr.mxu0 0.0
    %415 = vmatpush1.msra.mxu0 0.0
    %416 = vmatprep.subr.mxu0 0.0
    %417 = vmatpush1.msra.mxu0 0.0
    %418 = vmatprep.subr.mxu0 0.0
    %419 = vmatpush1.msra.mxu0 0.0
    %420 = vmatprep.subr.mxu0 0.0
    %421 = vmatpush1.msra.mxu0 0.0
    %422 = vmatprep.subr.mxu0 0.0
    %423 = vmatpush1.msra.mxu0 0.0
    %v424 = vand.u32 %v52, 4294901760
    %v425 = vsub.f32 %v52, %v424
    %v426 = vand.u32 %v425, 4294901760
    %427 = vmatprep.subr.mxu0 %v426
    %v428 = vand.u32 %v51, 4294901760
    %v429 = vsub.f32 %v51, %v428
    %v430 = vand.u32 %v429, 4294901760
    %431 = vmatpush1.msra.mxu0 %v430
    %432 = vmatprep.subr.mxu0 0.0
    %433 = vmatpush2.msra.mxu0 0.0
    %434 = vmatprep.subr.mxu0 0.0
    %435 = vmatpush2.msra.mxu0 0.0
    %436 = vmatprep.subr.mxu0 0.0
    %437 = vmatpush2.msra.mxu0 0.0
    %438 = vmatprep.subr.mxu0 0.0
    %439 = vmatpush2.msra.mxu0 0.0
    %440 = vmatprep.subr.mxu0 0.0
    %441 = vmatpush2.msra.mxu0 0.0
    %442 = vmatprep.subr.mxu0 0.0
    %443 = vmatpush2.msra.mxu0 0.0
    %444 = vmatprep.subr.mxu0 0.0
    %445 = vmatpush2.msra.mxu0 0.0
    %446 = vmatprep.subr.mxu0 0.0
    %447 = vmatpush2.msra.mxu0 0.0
    %448 = vmatprep.subr.mxu0 0.0
    %449 = vmatpush2.msra.mxu0 0.0
    %450 = vmatprep.subr.mxu0 0.0
    %451 = vmatpush2.msra.mxu0 0.0
    %452 = vmatprep.subr.mxu0 0.0
    %453 = vmatpush2.msra.mxu0 0.0
    %454 = vmatprep.subr.mxu0 0.0
    %455 = vmatpush2.msra.mxu0 0.0
    %456 = vmatprep.subr.mxu0 0.0
    %457 = vmatpush2.msra.mxu0 0.0
    %458 = vmatprep.subr.mxu0 0.0
    %459 = vmatpush2.msra.mxu0 0.0
    %460 = vmatprep.subr.mxu0 0.0
    %461 = vmatpush2.msra.mxu0 0.0
    %462 = vmatprep.subr.mxu0 0.0
    %463 = vmatpush2.msra.mxu0 0.0
    %464 = vmatprep.mubr.f32.mxu0 0.0
    %v465 = vand.u32 %v79, 4294901760
    %466 = vmatmul.mubr.f32.gmra.mxu0 %v465
    %v467 = vpop.f32.mrf.mxu0
    %v468 = vadd.f32 %v390, %v467
    %v469 = vpop.f32.mrf.mxu0
    %v470 = vadd.f32 %v392, %v469
    %471 = vdwg.mxu0
    %472 = vmatprep.subr.mxu0 0.0
    %473 = vmatpush1.msra.mxu0 0.0
    %474 = vmatprep.subr.mxu0 0.0
    %475 = vmatpush1.msra.mxu0 0.0
    %476 = vmatprep.subr.mxu0 0.0
    %477 = vmatpush1.msra.mxu0 0.0
    %478 = vmatprep.subr.mxu0 0.0
    %479 = vmatpush1.msra.mxu0 0.0
    %480 = vmatprep.subr.mxu0 0.0
    %481 = vmatpush1.msra.mxu0 0.0
    %482 = vmatprep.subr.mxu0 0.0
    %483 = vmatpush1.msra.mxu0 0.0
    %484 = vmatprep.subr.mxu0 0.0
    %485 = vmatpush1.msra.mxu0 0.0
    %486 = vmatprep.subr.mxu0 0.0
    %487 = vmatpush1.msra.mxu0 0.0
    %488 = vmatprep.subr.mxu0 0.0
    %489 = vmatpush1.msra.mxu0 0.0
    %490 = vmatprep.subr.mxu0 0.0
    %491 = vmatpush1.msra.mxu0 0.0
    %492 = vmatprep.subr.mxu0 0.0
    %493 = vmatpush1.msra.mxu0 0.0
    %494 = vmatprep.subr.mxu0 0.0
    %495 = vmatpush1.msra.mxu0 0.0
    %496 = vmatprep.subr.mxu0 0.0
    %497 = vmatpush1.msra.mxu0 0.0
    %498 = vmatprep.subr.mxu0 0.0
    %499 = vmatpush1.msra.mxu0 0.0
    %500 = vmatprep.subr.mxu0 0.0
    %501 = vmatpush1.msra.mxu0 0.0
    %v502 = vand.u32 %v52, 4294901760
    %503 = vmatprep.subr.mxu0 %v502
    %v504 = vand.u32 %v51, 4294901760
    %505 = vmatpush1.msra.mxu0 %v504
    %506 = vmatprep.subr.mxu0 0.0
    %507 = vmatpush2.msra.mxu0 0.0
    %508 = vmatprep.subr.mxu0 0.0
    %509 = vmatpush2.msra.mxu0 0.0
    %510 = vmatprep.subr.mxu0 0.0
    %511 = vmatpush2.msra.mxu0 0.0
    %512 = vmatprep.subr.mxu0 0.0
    %513 = vmatpush2.msra.mxu0 0.0
    %514 = vmatprep.subr.mxu0 0.0
    %515 = vmatpush2.msra.mxu0 0.0
    %516 = vmatprep.subr.mxu0 0.0
    %517 = vmatpush2.msra.mxu0 0.0
    %518 = vmatprep.subr.mxu0 0.0
    %519 = vmatpush2.msra.mxu0 0.0
    %520 = vmatprep.subr.mxu0 0.0
    %521 = vmatpush2.msra.mxu0 0.0
    %522 = vmatprep.subr.mxu0 0.0
    %523 = vmatpush2.msra.mxu0 0.0
    %524 = vmatprep.subr.mxu0 0.0
    %525 = vmatpush2.msra.mxu0 0.0
    %526 = vmatprep.subr.mxu0 0.0
    %527 = vmatpush2.msra.mxu0 0.0
    %528 = vmatprep.subr.mxu0 0.0
    %529 = vmatpush2.msra.mxu0 0.0
    %530 = vmatprep.subr.mxu0 0.0
    %531 = vmatpush2.msra.mxu0 0.0
    %532 = vmatprep.subr.mxu0 0.0
    %533 = vmatpush2.msra.mxu0 0.0
    %534 = vmatprep.subr.mxu0 0.0
    %535 = vmatpush2.msra.mxu0 0.0
    %536 = vmatprep.subr.mxu0 0.0
    %537 = vmatpush2.msra.mxu0 0.0
    %538 = vmatprep.mubr.f32.mxu0 0.0
    %v539 = vand.u32 %v79, 4294901760
    %540 = vmatmul.mubr.f32.gmra.mxu0 %v539
    %v541 = vpop.f32.mrf.mxu0
    %v542 = vadd.f32 %v468, %v541
    %v543 = vpop.f32.mrf.mxu0
    %v544 = vadd.f32 %v470, %v543
    %545 = vdwg.mxu0
    %546 = vmatprep.subr.mxu0 0.0
    %547 = vmatpush1.msra.mxu0 0.0
    %548 = vmatprep.subr.mxu0 0.0
    %549 = vmatpush1.msra.mxu0 0.0
    %550 = vmatprep.subr.mxu0 0.0
    %551 = vmatpush1.msra.mxu0 0.0
    %552 = vmatprep.subr.mxu0 0.0
    %553 = vmatpush1.msra.mxu0 0.0
    %554 = vmatprep.subr.mxu0 0.0
    %555 = vmatpush1.msra.mxu0 0.0
    %556 = vmatprep.subr.mxu0 0.0
    %557 = vmatpush1.msra.mxu0 0.0
    %558 = vmatprep.subr.mxu0 0.0
    %559 = vmatpush1.msra.mxu0 0.0
    %560 = vmatprep.subr.mxu0 0.0
    %561 = vmatpush1.msra.mxu0 0.0
    %562 = vmatprep.subr.mxu0 0.0
    %563 = vmatpush1.msra.mxu0 0.0
    %564 = vmatprep.subr.mxu0 0.0
    %565 = vmatpush1.msra.mxu0 0.0
    %566 = vmatprep.subr.mxu0 0.0
    %567 = vmatpush1.msra.mxu0 0.0
    %568 = vmatprep.subr.mxu0 0.0
    %569 = vmatpush1.msra.mxu0 0.0
    %570 = vmatprep.subr.mxu0 0.0
    %571 = vmatpush1.msra.mxu0 0.0
    %572 = vmatprep.subr.mxu0 0.0
    %573 = vmatpush1.msra.mxu0 0.0
    %574 = vmatprep.subr.mxu0 0.0
    %575 = vmatpush1.msra.mxu0 0.0
    %v576 = vand.u32 %v54, 4294901760
    %577 = vmatprep.subr.mxu0 %v576
    %v578 = vand.u32 %v53, 4294901760
    %579 = vmatpush1.msra.mxu0 %v578
    %580 = vmatprep.subr.mxu0 0.0
    %581 = vmatpush2.msra.mxu0 0.0
    %582 = vmatprep.subr.mxu0 0.0
    %583 = vmatpush2.msra.mxu0 0.0
    %584 = vmatprep.subr.mxu0 0.0
    %585 = vmatpush2.msra.mxu0 0.0
    %586 = vmatprep.subr.mxu0 0.0
    %587 = vmatpush2.msra.mxu0 0.0
    %588 = vmatprep.subr.mxu0 0.0
    %589 = vmatpush2.msra.mxu0 0.0
    %590 = vmatprep.subr.mxu0 0.0
    %591 = vmatpush2.msra.mxu0 0.0
    %592 = vmatprep.subr.mxu0 0.0
    %593 = vmatpush2.msra.mxu0 0.0
    %594 = vmatprep.subr.mxu0 0.0
    %595 = vmatpush2.msra.mxu0 0.0
    %596 = vmatprep.subr.mxu0 0.0
    %597 = vmatpush2.msra.mxu0 0.0
    %598 = vmatprep.subr.mxu0 0.0
    %599 = vmatpush2.msra.mxu0 0.0
    %600 = vmatprep.subr.mxu0 0.0
    %601 = vmatpush2.msra.mxu0 0.0
    %602 = vmatprep.subr.mxu0 0.0
    %603 = vmatpush2.msra.mxu0 0.0
    %604 = vmatprep.subr.mxu0 0.0
    %605 = vmatpush2.msra.mxu0 0.0
    %606 = vmatprep.subr.mxu0 0.0
    %607 = vmatpush2.msra.mxu0 0.0
    %608 = vmatprep.subr.mxu0 0.0
    %609 = vmatpush2.msra.mxu0 0.0
    %610 = vmatprep.subr.mxu0 0.0
    %611 = vmatpush2.msra.mxu0 0.0
    %612 = vmatprep.mubr.f32.mxu0 0.0
    %v613 = vand.u32 %v79, 4294901760
    %v614 = vsub.f32 %v79, %v613
    %v615 = vand.u32 %v614, 4294901760
    %v616 = vsub.f32 %v614, %v615
    %v617 = vand.u32 %v616, 4294901760
    %618 = vmatmul.mubr.f32.gmra.mxu0 %v617
    %v619 = vpop.f32.mrf.mxu0
    %v620 = vadd.f32 %v68, %v619
    %v621 = vpop.f32.mrf.mxu0
    %v622 = vadd.f32 %v72, %v621
    %623 = vdwg.mxu0
    %624 = vmatprep.subr.mxu0 0.0
    %625 = vmatpush1.msra.mxu0 0.0
    %626 = vmatprep.subr.mxu0 0.0
    %627 = vmatpush1.msra.mxu0 0.0
    %628 = vmatprep.subr.mxu0 0.0
    %629 = vmatpush1.msra.mxu0 0.0
    %630 = vmatprep.subr.mxu0 0.0
    %631 = vmatpush1.msra.mxu0 0.0
    %632 = vmatprep.subr.mxu0 0.0
    %633 = vmatpush1.msra.mxu0 0.0
    %634 = vmatprep.subr.mxu0 0.0
    %635 = vmatpush1.msra.mxu0 0.0
    %636 = vmatprep.subr.mxu0 0.0
    %637 = vmatpush1.msra.mxu0 0.0
    %638 = vmatprep.subr.mxu0 0.0
    %639 = vmatpush1.msra.mxu0 0.0
    %640 = vmatprep.subr.mxu0 0.0
    %641 = vmatpush1.msra.mxu0 0.0
    %642 = vmatprep.subr.mxu0 0.0
    %643 = vmatpush1.msra.mxu0 0.0
    %644 = vmatprep.subr.mxu0 0.0
    %645 = vmatpush1.msra.mxu0 0.0
    %646 = vmatprep.subr.mxu0 0.0
    %647 = vmatpush1.msra.mxu0 0.0
    %648 = vmatprep.subr.mxu0 0.0
    %649 = vmatpush1.msra.mxu0 0.0
    %650 = vmatprep.subr.mxu0 0.0
    %651 = vmatpush1.msra.mxu0 0.0
    %652 = vmatprep.subr.mxu0 0.0
    %653 = vmatpush1.msra.mxu0 0.0
    %v654 = vand.u32 %v54, 4294901760
    %v655 = vsub.f32 %v54, %v654
    %v656 = vand.u32 %v655, 4294901760
    %v657 = vsub.f32 %v655, %v656
    %v658 = vand.u32 %v657, 4294901760
    %659 = vmatprep.subr.mxu0 %v658
    %v660 = vand.u32 %v53, 4294901760
    %v661 = vsub.f32 %v53, %v660
    %v662 = vand.u32 %v661, 4294901760
    %v663 = vsub.f32 %v661, %v662
    %v664 = vand.u32 %v663, 4294901760
    %665 = vmatpush1.msra.mxu0 %v664
    %666 = vmatprep.subr.mxu0 0.0
    %667 = vmatpush2.msra.mxu0 0.0
    %668 = vmatprep.subr.mxu0 0.0
    %669 = vmatpush2.msra.mxu0 0.0
    %670 = vmatprep.subr.mxu0 0.0
    %671 = vmatpush2.msra.mxu0 0.0
    %672 = vmatprep.subr.mxu0 0.0
    %673 = vmatpush2.msra.mxu0 0.0
    %674 = vmatprep.subr.mxu0 0.0
    %675 = vmatpush2.msra.mxu0 0.0
    %676 = vmatprep.subr.mxu0 0.0
    %677 = vmatpush2.msra.mxu0 0.0
    %678 = vmatprep.subr.mxu0 0.0
    %679 = vmatpush2.msra.mxu0 0.0
    %680 = vmatprep.subr.mxu0 0.0
    %681 = vmatpush2.msra.mxu0 0.0
    %682 = vmatprep.subr.mxu0 0.0
    %683 = vmatpush2.msra.mxu0 0.0
    %684 = vmatprep.subr.mxu0 0.0
    %685 = vmatpush2.msra.mxu0 0.0
    %686 = vmatprep.subr.mxu0 0.0
    %687 = vmatpush2.msra.mxu0 0.0
    %688 = vmatprep.subr.mxu0 0.0
    %689 = vmatpush2.msra.mxu0 0.0
    %690 = vmatprep.subr.mxu0 0.0
    %691 = vmatpush2.msra.mxu0 0.0
    %692 = vmatprep.subr.mxu0 0.0
    %693 = vmatpush2.msra.mxu0 0.0
    %694 = vmatprep.subr.mxu0 0.0
    %695 = vmatpush2.msra.mxu0 0.0
    %696 = vmatprep.subr.mxu0 0.0
    %697 = vmatpush2.msra.mxu0 0.0
    %698 = vmatprep.mubr.f32.mxu0 0.0
    %v699 = vand.u32 %v79, 4294901760
    %700 = vmatmul.mubr.f32.gmra.mxu0 %v699
    %v701 = vpop.f32.mrf.mxu0
    %v702 = vadd.f32 %v620, %v701
    %v703 = vpop.f32.mrf.mxu0
    %v704 = vadd.f32 %v622, %v703
    %705 = vdwg.mxu0
    %706 = vmatprep.subr.mxu0 0.0
    %707 = vmatpush1.msra.mxu0 0.0
    %708 = vmatprep.subr.mxu0 0.0
    %709 = vmatpush1.msra.mxu0 0.0
    %710 = vmatprep.subr.mxu0 0.0
    %711 = vmatpush1.msra.mxu0 0.0
    %712 = vmatprep.subr.mxu0 0.0
    %713 = vmatpush1.msra.mxu0 0.0
    %714 = vmatprep.subr.mxu0 0.0
    %715 = vmatpush1.msra.mxu0 0.0
    %716 = vmatprep.subr.mxu0 0.0
    %717 = vmatpush1.msra.mxu0 0.0
    %718 = vmatprep.subr.mxu0 0.0
    %719 = vmatpush1.msra.mxu0 0.0
    %720 = vmatprep.subr.mxu0 0.0
    %721 = vmatpush1.msra.mxu0 0.0
    %722 = vmatprep.subr.mxu0 0.0
    %723 = vmatpush1.msra.mxu0 0.0
    %724 = vmatprep.subr.mxu0 0.0
    %725 = vmatpush1.msra.mxu0 0.0
    %726 = vmatprep.subr.mxu0 0.0
    %727 = vmatpush1.msra.mxu0 0.0
    %728 = vmatprep.subr.mxu0 0.0
    %729 = vmatpush1.msra.mxu0 0.0
    %730 = vmatprep.subr.mxu0 0.0
    %731 = vmatpush1.msra.mxu0 0.0
    %732 = vmatprep.subr.mxu0 0.0
    %733 = vmatpush1.msra.mxu0 0.0
    %734 = vmatprep.subr.mxu0 0.0
    %735 = vmatpush1.msra.mxu0 0.0
    %v736 = vand.u32 %v54, 4294901760
    %v737 = vsub.f32 %v54, %v736
    %738 = vmatprep.subr.mxu0 %v737
    %v739 = vand.u32 %v53, 4294901760
    %v740 = vsub.f32 %v53, %v739
    %741 = vmatpush1.msra.mxu0 %v740
    %742 = vmatprep.subr.mxu0 0.0
    %743 = vmatpush2.msra.mxu0 0.0
    %744 = vmatprep.subr.mxu0 0.0
    %745 = vmatpush2.msra.mxu0 0.0
    %746 = vmatprep.subr.mxu0 0.0
    %747 = vmatpush2.msra.mxu0 0.0
    %748 = vmatprep.subr.mxu0 0.0
    %749 = vmatpush2.msra.mxu0 0.0
    %750 = vmatprep.subr.mxu0 0.0
    %751 = vmatpush2.msra.mxu0 0.0
    %752 = vmatprep.subr.mxu0 0.0
    %753 = vmatpush2.msra.mxu0 0.0
    %754 = vmatprep.subr.mxu0 0.0
    %755 = vmatpush2.msra.mxu0 0.0
    %756 = vmatprep.subr.mxu0 0.0
    %757 = vmatpush2.msra.mxu0 0.0
    %758 = vmatprep.subr.mxu0 0.0
    %759 = vmatpush2.msra.mxu0 0.0
    %760 = vmatprep.subr.mxu0 0.0
    %761 = vmatpush2.msra.mxu0 0.0
    %762 = vmatprep.subr.mxu0 0.0
    %763 = vmatpush2.msra.mxu0 0.0
    %764 = vmatprep.subr.mxu0 0.0
    %765 = vmatpush2.msra.mxu0 0.0
    %766 = vmatprep.subr.mxu0 0.0
    %767 = vmatpush2.msra.mxu0 0.0
    %768 = vmatprep.subr.mxu0 0.0
    %769 = vmatpush2.msra.mxu0 0.0
    %770 = vmatprep.subr.mxu0 0.0
    %771 = vmatpush2.msra.mxu0 0.0
    %772 = vmatprep.subr.mxu0 0.0
    %773 = vmatpush2.msra.mxu0 0.0
    %774 = vmatprep.mubr.f32.mxu0 0.0
    %v775 = vand.u32 %v79, 4294901760
    %v776 = vsub.f32 %v79, %v775
    %777 = vmatmul.mubr.f32.gmra.mxu0 %v776
    %v778 = vpop.f32.mrf.mxu0
    %v779 = vadd.f32 %v702, %v778
    %v780 = vpop.f32.mrf.mxu0
    %v781 = vadd.f32 %v704, %v780
    %782 = vdwg.mxu0
    %783 = vmatprep.subr.mxu0 0.0
    %784 = vmatpush1.msra.mxu0 0.0
    %785 = vmatprep.subr.mxu0 0.0
    %786 = vmatpush1.msra.mxu0 0.0
    %787 = vmatprep.subr.mxu0 0.0
    %788 = vmatpush1.msra.mxu0 0.0
    %789 = vmatprep.subr.mxu0 0.0
    %790 = vmatpush1.msra.mxu0 0.0
    %791 = vmatprep.subr.mxu0 0.0
    %792 = vmatpush1.msra.mxu0 0.0
    %793 = vmatprep.subr.mxu0 0.0
    %794 = vmatpush1.msra.mxu0 0.0
    %795 = vmatprep.subr.mxu0 0.0
    %796 = vmatpush1.msra.mxu0 0.0
    %797 = vmatprep.subr.mxu0 0.0
    %798 = vmatpush1.msra.mxu0 0.0
    %799 = vmatprep.subr.mxu0 0.0
    %800 = vmatpush1.msra.mxu0 0.0
    %801 = vmatprep.subr.mxu0 0.0
    %802 = vmatpush1.msra.mxu0 0.0
    %803 = vmatprep.subr.mxu0 0.0
    %804 = vmatpush1.msra.mxu0 0.0
    %805 = vmatprep.subr.mxu0 0.0
    %806 = vmatpush1.msra.mxu0 0.0
    %807 = vmatprep.subr.mxu0 0.0
    %808 = vmatpush1.msra.mxu0 0.0
    %809 = vmatprep.subr.mxu0 0.0
    %810 = vmatpush1.msra.mxu0 0.0
    %811 = vmatprep.subr.mxu0 0.0
    %812 = vmatpush1.msra.mxu0 0.0
    %v813 = vand.u32 %v54, 4294901760
    %814 = vmatprep.subr.mxu0 %v813
    %v815 = vand.u32 %v53, 4294901760
    %816 = vmatpush1.msra.mxu0 %v815
    %817 = vmatprep.subr.mxu0 0.0
    %818 = vmatpush2.msra.mxu0 0.0
    %819 = vmatprep.subr.mxu0 0.0
    %820 = vmatpush2.msra.mxu0 0.0
    %821 = vmatprep.subr.mxu0 0.0
    %822 = vmatpush2.msra.mxu0 0.0
    %823 = vmatprep.subr.mxu0 0.0
    %824 = vmatpush2.msra.mxu0 0.0
    %825 = vmatprep.subr.mxu0 0.0
    %826 = vmatpush2.msra.mxu0 0.0
    %827 = vmatprep.subr.mxu0 0.0
    %828 = vmatpush2.msra.mxu0 0.0
    %829 = vmatprep.subr.mxu0 0.0
    %830 = vmatpush2.msra.mxu0 0.0
    %831 = vmatprep.subr.mxu0 0.0
    %832 = vmatpush2.msra.mxu0 0.0
    %833 = vmatprep.subr.mxu0 0.0
    %834 = vmatpush2.msra.mxu0 0.0
    %835 = vmatprep.subr.mxu0 0.0
    %836 = vmatpush2.msra.mxu0 0.0
    %837 = vmatprep.subr.mxu0 0.0
    %838 = vmatpush2.msra.mxu0 0.0
    %839 = vmatprep.subr.mxu0 0.0
    %840 = vmatpush2.msra.mxu0 0.0
    %841 = vmatprep.subr.mxu0 0.0
    %842 = vmatpush2.msra.mxu0 0.0
    %843 = vmatprep.subr.mxu0 0.0
    %844 = vmatpush2.msra.mxu0 0.0
    %845 = vmatprep.subr.mxu0 0.0
    %846 = vmatpush2.msra.mxu0 0.0
    %847 = vmatprep.subr.mxu0 0.0
    %848 = vmatpush2.msra.mxu0 0.0
    %849 = vmatprep.mubr.f32.mxu0 0.0
    %v850 = vand.u32 %v79, 4294901760
    %v851 = vsub.f32 %v79, %v850
    %v852 = vand.u32 %v851, 4294901760
    %853 = vmatmul.mubr.f32.gmra.mxu0 %v852
    %v854 = vpop.f32.mrf.mxu0
    %v855 = vadd.f32 %v779, %v854
    %v856 = vpop.f32.mrf.mxu0
    %v857 = vadd.f32 %v781, %v856
    %858 = vdwg.mxu0
    %859 = vmatprep.subr.mxu0 0.0
    %860 = vmatpush1.msra.mxu0 0.0
    %861 = vmatprep.subr.mxu0 0.0
    %862 = vmatpush1.msra.mxu0 0.0
    %863 = vmatprep.subr.mxu0 0.0
    %864 = vmatpush1.msra.mxu0 0.0
    %865 = vmatprep.subr.mxu0 0.0
    %866 = vmatpush1.msra.mxu0 0.0
    %867 = vmatprep.subr.mxu0 0.0
    %868 = vmatpush1.msra.mxu0 0.0
    %869 = vmatprep.subr.mxu0 0.0
    %870 = vmatpush1.msra.mxu0 0.0
    %871 = vmatprep.subr.mxu0 0.0
    %872 = vmatpush1.msra.mxu0 0.0
    %873 = vmatprep.subr.mxu0 0.0
    %874 = vmatpush1.msra.mxu0 0.0
    %875 = vmatprep.subr.mxu0 0.0
    %876 = vmatpush1.msra.mxu0 0.0
    %877 = vmatprep.subr.mxu0 0.0
    %878 = vmatpush1.msra.mxu0 0.0
    %879 = vmatprep.subr.mxu0 0.0
    %880 = vmatpush1.msra.mxu0 0.0
    %881 = vmatprep.subr.mxu0 0.0
    %882 = vmatpush1.msra.mxu0 0.0
    %883 = vmatprep.subr.mxu0 0.0
    %884 = vmatpush1.msra.mxu0 0.0
    %885 = vmatprep.subr.mxu0 0.0
    %886 = vmatpush1.msra.mxu0 0.0
    %887 = vmatprep.subr.mxu0 0.0
    %888 = vmatpush1.msra.mxu0 0.0
    %v889 = vand.u32 %v54, 4294901760
    %v890 = vsub.f32 %v54, %v889
    %v891 = vand.u32 %v890, 4294901760
    %892 = vmatprep.subr.mxu0 %v891
    %v893 = vand.u32 %v53, 4294901760
    %v894 = vsub.f32 %v53, %v893
    %v895 = vand.u32 %v894, 4294901760
    %896 = vmatpush1.msra.mxu0 %v895
    %897 = vmatprep.subr.mxu0 0.0
    %898 = vmatpush2.msra.mxu0 0.0
    %899 = vmatprep.subr.mxu0 0.0
    %900 = vmatpush2.msra.mxu0 0.0
    %901 = vmatprep.subr.mxu0 0.0
    %902 = vmatpush2.msra.mxu0 0.0
    %903 = vmatprep.subr.mxu0 0.0
    %904 = vmatpush2.msra.mxu0 0.0
    %905 = vmatprep.subr.mxu0 0.0
    %906 = vmatpush2.msra.mxu0 0.0
    %907 = vmatprep.subr.mxu0 0.0
    %908 = vmatpush2.msra.mxu0 0.0
    %909 = vmatprep.subr.mxu0 0.0
    %910 = vmatpush2.msra.mxu0 0.0
    %911 = vmatprep.subr.mxu0 0.0
    %912 = vmatpush2.msra.mxu0 0.0
    %913 = vmatprep.subr.mxu0 0.0
    %914 = vmatpush2.msra.mxu0 0.0
    %915 = vmatprep.subr.mxu0 0.0
    %916 = vmatpush2.msra.mxu0 0.0
    %917 = vmatprep.subr.mxu0 0.0
    %918 = vmatpush2.msra.mxu0 0.0
    %919 = vmatprep.subr.mxu0 0.0
    %920 = vmatpush2.msra.mxu0 0.0
    %921 = vmatprep.subr.mxu0 0.0
    %922 = vmatpush2.msra.mxu0 0.0
    %923 = vmatprep.subr.mxu0 0.0
    %924 = vmatpush2.msra.mxu0 0.0
    %925 = vmatprep.subr.mxu0 0.0
    %926 = vmatpush2.msra.mxu0 0.0
    %927 = vmatprep.subr.mxu0 0.0
    %928 = vmatpush2.msra.mxu0 0.0
    %929 = vmatprep.mubr.f32.mxu0 0.0
    %v930 = vand.u32 %v79, 4294901760
    %931 = vmatmul.mubr.f32.gmra.mxu0 %v930
    %v932 = vpop.f32.mrf.mxu0
    %v933 = vadd.f32 %v855, %v932
    %v934 = vpop.f32.mrf.mxu0
    %v935 = vadd.f32 %v857, %v934
    %936 = vdwg.mxu0
    %937 = vmatprep.subr.mxu0 0.0
    %938 = vmatpush1.msra.mxu0 0.0
    %939 = vmatprep.subr.mxu0 0.0
    %940 = vmatpush1.msra.mxu0 0.0
    %941 = vmatprep.subr.mxu0 0.0
    %942 = vmatpush1.msra.mxu0 0.0
    %943 = vmatprep.subr.mxu0 0.0
    %944 = vmatpush1.msra.mxu0 0.0
    %945 = vmatprep.subr.mxu0 0.0
    %946 = vmatpush1.msra.mxu0 0.0
    %947 = vmatprep.subr.mxu0 0.0
    %948 = vmatpush1.msra.mxu0 0.0
    %949 = vmatprep.subr.mxu0 0.0
    %950 = vmatpush1.msra.mxu0 0.0
    %951 = vmatprep.subr.mxu0 0.0
    %952 = vmatpush1.msra.mxu0 0.0
    %953 = vmatprep.subr.mxu0 0.0
    %954 = vmatpush1.msra.mxu0 0.0
    %955 = vmatprep.subr.mxu0 0.0
    %956 = vmatpush1.msra.mxu0 0.0
    %957 = vmatprep.subr.mxu0 0.0
    %958 = vmatpush1.msra.mxu0 0.0
    %959 = vmatprep.subr.mxu0 0.0
    %960 = vmatpush1.msra.mxu0 0.0
    %961 = vmatprep.subr.mxu0 0.0
    %962 = vmatpush1.msra.mxu0 0.0
    %963 = vmatprep.subr.mxu0 0.0
    %964 = vmatpush1.msra.mxu0 0.0
    %965 = vmatprep.subr.mxu0 0.0
    %966 = vmatpush1.msra.mxu0 0.0
    %v967 = vand.u32 %v54, 4294901760
    %968 = vmatprep.subr.mxu0 %v967
    %v969 = vand.u32 %v53, 4294901760
    %970 = vmatpush1.msra.mxu0 %v969
    %971 = vmatprep.subr.mxu0 0.0
    %972 = vmatpush2.msra.mxu0 0.0
    %973 = vmatprep.subr.mxu0 0.0
    %974 = vmatpush2.msra.mxu0 0.0
    %975 = vmatprep.subr.mxu0 0.0
    %976 = vmatpush2.msra.mxu0 0.0
    %977 = vmatprep.subr.mxu0 0.0
    %978 = vmatpush2.msra.mxu0 0.0
    %979 = vmatprep.subr.mxu0 0.0
    %980 = vmatpush2.msra.mxu0 0.0
    %981 = vmatprep.subr.mxu0 0.0
    %982 = vmatpush2.msra.mxu0 0.0
    %983 = vmatprep.subr.mxu0 0.0
    %984 = vmatpush2.msra.mxu0 0.0
    %985 = vmatprep.subr.mxu0 0.0
    %986 = vmatpush2.msra.mxu0 0.0
    %987 = vmatprep.subr.mxu0 0.0
    %988 = vmatpush2.msra.mxu0 0.0
    %989 = vmatprep.subr.mxu0 0.0
    %990 = vmatpush2.msra.mxu0 0.0
    %991 = vmatprep.subr.mxu0 0.0
    %992 = vmatpush2.msra.mxu0 0.0
    %993 = vmatprep.subr.mxu0 0.0
    %994 = vmatpush2.msra.mxu0 0.0
    %995 = vmatprep.subr.mxu0 0.0
    %996 = vmatpush2.msra.mxu0 0.0
    %997 = vmatprep.subr.mxu0 0.0
    %998 = vmatpush2.msra.mxu0 0.0
    %999 = vmatprep.subr.mxu0 0.0
    %1000 = vmatpush2.msra.mxu0 0.0
    %1001 = vmatprep.subr.mxu0 0.0
    %1002 = vmatpush2.msra.mxu0 0.0
    %1003 = vmatprep.mubr.f32.mxu0 0.0
    %v1004 = vand.u32 %v79, 4294901760
    %1005 = vmatmul.mubr.f32.gmra.mxu0 %v1004
    %v1006 = vpop.f32.mrf.mxu0
    %v1007 = vadd.f32 %v933, %v1006
    %v1008 = vpop.f32.mrf.mxu0
    %v1009 = vadd.f32 %v935, %v1008
    %1010 = vdwg.mxu0
    %1011 = vst [vmem:[#allocation8] sm:$0xff] %v542
    %1012 = vst [vmem:[#allocation8 + $0x8] sm:$0xff] %v544
    %1013 = vst [vmem:[#allocation8 + $0x10] sm:$0xff] %v1007
    %1014 = vst [vmem:[#allocation8 + $0x18] sm:$0xff] %v1009
    // Predicated region
    $region26: #{tpu_custom_call.1} parent=1 // pred_check
      _
    $region27: #{tpu_custom_call.1} parent=1 // pred_check_branch
      %1016 = sbr.rel (0) target = $region29
    $region28: #{tpu_custom_call.1} parent=1 // pred_region
      %s1018 = ssub.s32 512, 512
      %1019 = vsyncadd [#allocation4], %s1018
      %s1021 = sshll.u32 [#allocation8], 4
      %s1022 = int_to_ptr.vmem [resolvable:$true] %s1021
      %1024 = dma.vmem_to_hbm [thread:$0]  %s1022, 512, %s3, [#allocation4]
    $region29: #{tpu_custom_call.1} parent=1 // pred_fallthru
      _
    // Predicated region
    $region30: #{tpu_custom_call.1} parent=1 // pred_check
      _
    $region31: #{tpu_custom_call.1} parent=1 // pred_check_branch
      %1026 = sbr.rel (0) target = $region33
    $region32: #{tpu_custom_call.1} parent=1 // pred_region
      %1027 = dma.done [#allocation4], 512
    $region33: #{tpu_custom_call.1} parent=1 // pred_fallthru
      _
    %1028 = vsyncpa [#allocation3], 1
    %1029 = vsyncpa [#allocation6], 1
    %1030 = vsyncpa [#allocation4], 1

</llo_original>
